<compile_context>
chip_gen: v7x
topology: tpu7x:2x2x1
jax: 0.10.0
libtpu: 0.0.40
codegen_flags: <defaults>
</compile_context>

<pallas_src>
import jax
import jax.numpy as jnp
from jax.experimental import pallas as pl
from jax.experimental.pallas import tpu as pltpu


def _round_up(a: int, b: int) -> int:
    return ((a + b - 1) // b) * b


def _make_layernorm_kernel(c_true: int, c_padded: int):
    """Build a kernel closed over the true feature width (compile-time const)."""
    needs_mask = c_padded != c_true
    inv_c = 1.0 / float(c_true)

    def kernel(x_ref, w_ref, b_ref, o_ref):
        # x_ref: (TM, Cp)   w_ref/b_ref: (1, Cp) float32   o_ref: (TM, Cp)
        x = x_ref[...].astype(jnp.float32)
        w = w_ref[...]          # already float32 (pre-cast in wrapper)
        b = b_ref[...]

        if needs_mask:
            # Padded lanes (>= c_true) are zero in the input; exclude them from
            # the mean/variance so statistics use the true C only.
            lane = jax.lax.broadcasted_iota(jnp.int32, x.shape, dimension=1)
            valid = lane < c_true
            xs = jnp.where(valid, x, 0.0)
            mu = jnp.sum(xs, axis=-1, keepdims=True) * inv_c
            d = jnp.where(valid, x - mu, 0.0)
            var = jnp.sum(d * d, axis=-1, keepdims=True) * inv_c
            y = (x - mu) * jax.lax.rsqrt(var + 1e-5)
        else:
            mu = jnp.mean(x, axis=-1, keepdims=True)
            d = x - mu
            var = jnp.mean(d * d, axis=-1, keepdims=True)  # unbiased=False
            y = d * jax.lax.rsqrt(var + 1e-5)

        o_ref[...] = (y * w + b).astype(o_ref.dtype)

    return kernel


def withbias_layernorm(x, weight, bias, *, max_block_rows=2048,
                       vmem_limit_bytes=48 * 1024 * 1024):
    """LayerNorm over the last axis: (x - mean) / sqrt(var + 1e-5) * weight + bias."""
    orig_shape = x.shape
    C = orig_shape[-1]
    R = 1
    for s in orig_shape[:-1]:
        R *= s

    itemsize = jnp.dtype(x.dtype).itemsize
    # Sublane packing: 8 rows for f32, 16 for bf16, 32 for int8/fp8.
    sub = max(8, 32 // itemsize)
    # Lane-dense feature axis: multiple of 128 avoids masked partial stores.
    Cp = _round_up(C, 128)

    # Row-tile budget: double-buffered in+out tiles plus f32 intermediates must
    # fit well under the scoped-VMEM limit on every generation (v7x = 64 MiB
    # physical / 32 MiB default scope; v5e default scope = 16 MiB — we raise
    # the limit explicitly below but still stay conservative).
    tile_budget_bytes = 20 * 1024 * 1024
    per_row_bytes = Cp * (2 * itemsize + 2 * itemsize + 3 * 4)  # 2x in, 2x out (dbl-buf), ~3 f32 temps
    tm = max(sub, min(max_block_rows, tile_budget_bytes // max(per_row_bytes, 1)))
    # Keep a few grid steps so the pipeline stays warm and v7x can shard the
    # parallel axis across its 2 TensorCores.
    if R >= sub * 4:
        tm = min(tm, max(sub, pl.cdiv(R, 4)))
    # Don't tile beyond what the (padded) data needs.
    tm = min(tm, _round_up(R, sub))
    tm = max(sub, (tm // sub) * sub)  # dtype-sublane aligned

    Rp = _round_up(R, tm)
    pad_r = Rp - R
    pad_c = Cp - C

    x2 = x.reshape(R, C)
    if pad_r or pad_c:
        x2 = jnp.pad(x2, ((0, pad_r), (0, pad_c)))
    w2 = weight.astype(jnp.float32).reshape(1, C)
    b2 = bias.astype(jnp.float32).reshape(1, C)
    if pad_c:
        w2 = jnp.pad(w2, ((0, 0), (0, pad_c)))
        b2 = jnp.pad(b2, ((0, 0), (0, pad_c)))

    grid = (Rp // tm,)
    kernel = _make_layernorm_kernel(C, Cp)

    out = pl.pallas_call(
        kernel,
        out_shape=jax.ShapeDtypeStruct((Rp, Cp), x.dtype),
        grid_spec=pltpu.PrefetchScalarGridSpec(
            num_scalar_prefetch=0,
            grid=grid,
            in_specs=[
                pl.BlockSpec((tm, Cp), lambda i: (i, 0)),
                pl.BlockSpec((1, Cp), lambda i: (0, 0)),
                pl.BlockSpec((1, Cp), lambda i: (0, 0)),
            ],
            out_specs=pl.BlockSpec((tm, Cp), lambda i: (i, 0)),
        ),
        compiler_params=pltpu.CompilerParams(
            dimension_semantics=("parallel",),
            vmem_limit_bytes=vmem_limit_bytes,
        ),
    )(x2, w2, b2)

    if pad_r or pad_c:
        out = out[:R, :C]
    return out.reshape(orig_shape)


def _reference(x, weight, bias):
    mu = jnp.mean(x, axis=-1, keepdims=True)
    var = jnp.mean((x - mu) ** 2, axis=-1, keepdims=True)
    return (x - mu) / jnp.sqrt(var + 1e-5) * weight + bias


if __name__ == "__main__":
    key = jax.random.PRNGKey(0)

    # Small shape consistent with the module: normalize over the last dim C.
    B, S, C = 2, 8, 32  # tokens of a (B, H*W, C) feature map
    x = jax.random.normal(key, (B, S, C), dtype=jnp.float32)
    weight = jnp.ones((C,), dtype=jnp.float32)  # WithBias_LayerNorm init
    bias = jnp.zeros((C,), dtype=jnp.float32)

    y = withbias_layernorm(x, weight, bias)
    y = jax.block_until_ready(y)
    assert jnp.allclose(y, _reference(x, weight, bias), atol=1e-5, rtol=1e-5), \
        "mismatch vs reference (primary shape)"

    # Exercise the row- and lane-padding paths (R and C not tile-aligned).
    k2 = jax.random.PRNGKey(1)
    x2 = jax.random.normal(k2, (3, 7, 48), dtype=jnp.float32)
    w2 = jax.random.normal(jax.random.PRNGKey(2), (48,), dtype=jnp.float32)
    b2 = jax.random.normal(jax.random.PRNGKey(3), (48,), dtype=jnp.float32)
    y2 = jax.block_until_ready(withbias_layernorm(x2, w2, b2))
    assert jnp.allclose(y2, _reference(x2, w2, b2), atol=1e-5, rtol=1e-5), \
        "mismatch vs reference (padded shape)"

    print("KERNEL_OK")
</pallas_src>

<mosaic_0001>
module attributes {stable_mosaic.version = 11 : i64} {
  func.func @kernel(%arg0: i32, %arg1: memref<16x128xf32, #tpu.memory_space<vmem>>, %arg2: memref<1x128xf32, #tpu.memory_space<vmem>>, %arg3: memref<1x128xf32, #tpu.memory_space<vmem>>, %arg4: memref<16x128xf32, #tpu.memory_space<vmem>>) attributes {dimension_semantics = [#tpu.dimension_semantics<parallel>], iteration_bounds = array<i64: 1>, scalar_prefetch = 0 : i64, scratch_operands = 0 : i64, tpu.core_type = #tpu.core_type<tc>, window_params = [{transform_indices = @transform_0, window_bounds = array<i64: 16, 128>}, {pipeline_mode = #tpu.pipeline_mode<synchronous>, transform_indices = @transform_1, window_bounds = array<i64: 1, 128>}, {pipeline_mode = #tpu.pipeline_mode<synchronous>, transform_indices = @transform_2, window_bounds = array<i64: 1, 128>}, {transform_indices = @transform_3, window_bounds = array<i64: 16, 128>}]} {
    %c0 = arith.constant 0 : index
    %c0_0 = arith.constant 0 : index
    %0 = vector.load %arg1[%c0, %c0_0] : memref<16x128xf32, #tpu.memory_space<vmem>>, vector<16x128xf32>
    %c0_1 = arith.constant 0 : index
    %c0_2 = arith.constant 0 : index
    %1 = vector.load %arg2[%c0_1, %c0_2] : memref<1x128xf32, #tpu.memory_space<vmem>>, vector<1x128xf32>
    %c0_3 = arith.constant 0 : index
    %c0_4 = arith.constant 0 : index
    %2 = vector.load %arg3[%c0_3, %c0_4] : memref<1x128xf32, #tpu.memory_space<vmem>>, vector<1x128xf32>
    %3 = tpu.iota {dimensions = array<i32: 1>} : vector<16x128xi32>
    %c32_i32 = arith.constant 32 : i32
    %4 = vector.broadcast %c32_i32 : i32 to vector<16x128xi32>
    %5 = arith.cmpi slt, %3, %4 : vector<16x128xi32>
    %cst = arith.constant 0.000000e+00 : f32
    %6 = vector.broadcast %cst : f32 to vector<16x128xf32>
    %7 = arith.select %5, %0, %6 : vector<16x128xi1>, vector<16x128xf32>
    %cst_5 = arith.constant dense<0.000000e+00> : vector<16xf32>
    %8 = vector.multi_reduction <add>, %7, %cst_5 [1] : vector<16x128xf32> to vector<16xf32>
    %9 = vector.shape_cast %8 : vector<16xf32> to vector<16x1xf32>
    %cst_6 = arith.constant 3.125000e-02 : f32
    %10 = vector.broadcast %cst_6 : f32 to vector<16x1xf32>
    %11 = arith.mulf %9, %10 : vector<16x1xf32>
    %12 = vector.broadcast %11 : vector<16x1xf32> to vector<16x128xf32>
    %13 = arith.subf %0, %12 : vector<16x128xf32>
    %cst_7 = arith.constant 0.000000e+00 : f32
    %14 = vector.broadcast %cst_7 : f32 to vector<16x128xf32>
    %15 = arith.select %5, %13, %14 : vector<16x128xi1>, vector<16x128xf32>
    %16 = arith.mulf %15, %15 : vector<16x128xf32>
    %cst_8 = arith.constant dense<0.000000e+00> : vector<16xf32>
    %17 = vector.multi_reduction <add>, %16, %cst_8 [1] : vector<16x128xf32> to vector<16xf32>
    %18 = vector.shape_cast %17 : vector<16xf32> to vector<16x1xf32>
    %cst_9 = arith.constant 3.125000e-02 : f32
    %19 = vector.broadcast %cst_9 : f32 to vector<16x1xf32>
    %20 = arith.mulf %18, %19 : vector<16x1xf32>
    %21 = vector.broadcast %11 : vector<16x1xf32> to vector<16x128xf32>
    %22 = arith.subf %0, %21 : vector<16x128xf32>
    %cst_10 = arith.constant 9.99999974E-6 : f32
    %23 = vector.broadcast %cst_10 : f32 to vector<16x1xf32>
    %24 = arith.addf %20, %23 : vector<16x1xf32>
    %25 = math.rsqrt %24 : vector<16x1xf32>
    %26 = vector.broadcast %25 : vector<16x1xf32> to vector<16x128xf32>
    %27 = arith.mulf %22, %26 : vector<16x128xf32>
    %28 = vector.broadcast %1 : vector<1x128xf32> to vector<16x128xf32>
    %29 = arith.mulf %27, %28 : vector<16x128xf32>
    %30 = vector.broadcast %2 : vector<1x128xf32> to vector<16x128xf32>
    %31 = arith.addf %29, %30 : vector<16x128xf32>
    %c0_11 = arith.constant 0 : index
    %c0_12 = arith.constant 0 : index
    %32 = vector.load %arg4[%c0_11, %c0_12] : memref<16x128xf32, #tpu.memory_space<vmem>>, vector<16x128xf32>
    tpu.vector_store %arg4[%c0_11, %c0_12], %31 {strides = array<i32>} : memref<16x128xf32, #tpu.memory_space<vmem>>, vector<16x128xf32>,
    return
  }
  func.func @transform_0(%arg0: i32) -> (i32, i32) {
    %c0_i32 = arith.constant 0 : i32
    %c0_i32_0 = arith.constant 0 : i32
    return %arg0, %c0_i32 : i32, i32
  }
  func.func @transform_1(%arg0: i32) -> (i32, i32) {
    %c0_i32 = arith.constant 0 : i32
    %c0_i32_0 = arith.constant 0 : i32
    %c0_i32_1 = arith.constant 0 : i32
    return %c0_i32, %c0_i32_0 : i32, i32
  }
  func.func @transform_2(%arg0: i32) -> (i32, i32) {
    %c0_i32 = arith.constant 0 : i32
    %c0_i32_0 = arith.constant 0 : i32
    %c0_i32_1 = arith.constant 0 : i32
    return %c0_i32, %c0_i32_0 : i32, i32
  }
  func.func @transform_3(%arg0: i32) -> (i32, i32) {
    %c0_i32 = arith.constant 0 : i32
    %c0_i32_0 = arith.constant 0 : i32
    return %arg0, %c0_i32 : i32, i32
  }
}

</mosaic_0001>

<llo_original>
// kernel: tpu_custom_call.1
$region0: #{tpu_custom_call.1}
  #allocation0 [shape = 'u32[]', space=smem, size = 0x4, offset = 0x4, fixed_abs, tag = 'smem constant byte address 0x4 - core index']
  #allocation1 [shape = 'u32[144,128]{1,0:T(1,128)}', space=vmem, size = 0x12000, scoped, tag = 'internal scratch']
  %s0 = inlined_call_operand.hbm [shape: f32[16,128], index: 0, kind: input, shape index: {}]
  %s1 = inlined_call_operand.vmem [shape: f32[1,128], index: 1, kind: input, shape index: {}]
  %s2 = inlined_call_operand.vmem [shape: f32[1,128], index: 2, kind: input, shape index: {}]
  %s3 = inlined_call_operand.hbm [shape: f32[16,128], index: 3, kind: output, shape index: {}]
  %s4 = sld [smem:[#allocation0]]
  $region26: #{tpu_custom_call.1} parent=0
    _
  %s6 = ssub.s32 1, %s4
  %s7 = scalar_select 0, %s6, %s4
  $region1: #{tpu_custom_call.1} parent=0
    #allocation2 [shape = 'u8[8192]{0}', space=vmem, size = 0x2000, scoped, tag = 'input window, operand 0, single buffered']
    #allocation3 [shape = 's32[1]{0}', space=sflag, size = 0x4, scoped, tag = 'scoped memory for tpu_custom_call.1']
    #allocation4 [shape = 's32[1]{0}', space=sflag, size = 0x4, scoped, tag = 'scoped memory for tpu_custom_call.1']
    #allocation5 [shape = 'u8[8192]{0}', space=vmem, size = 0x2000, scoped, tag = 'output window, operand 0, single buffered']
    %8 = vsyncpa [#allocation3], 0
    %9 = vsyncpa [#allocation4], 0
    // Predicated region
    $region2: #{tpu_custom_call.1} parent=1 // pred_check
      _
    $region3: #{tpu_custom_call.1} parent=1 // pred_check_branch
      %11 = sbr.rel (0) target = $region5
    $region4: #{tpu_custom_call.1} parent=1 // pred_region
      %s13 = ssub.s32 256, 256
      %14 = vsyncadd [#allocation3], %s13
      %s15 = sshll.u32 [#allocation2], 4
      %s16 = int_to_ptr.vmem [resolvable:$true] %s15
      %21 = dma.hbm_to_vmem [thread:$0]  %s0, 256, %s16, [#allocation3], 128, 128, 8
    $region5: #{tpu_custom_call.1} parent=1 // pred_fallthru
      _
    // Predicated region
    $region6: #{tpu_custom_call.1} parent=1 // pred_check
      _
    $region7: #{tpu_custom_call.1} parent=1 // pred_check_branch
      %23 = sbr.rel (0) target = $region9
    $region8: #{tpu_custom_call.1} parent=1 // pred_region
      _
    $region9: #{tpu_custom_call.1} parent=1 // pred_fallthru
      _
    // Predicated region
    $region10: #{tpu_custom_call.1} parent=1 // pred_check
      _
    $region11: #{tpu_custom_call.1} parent=1 // pred_check_branch
      %25 = sbr.rel (0) target = $region13
    $region12: #{tpu_custom_call.1} parent=1 // pred_region
      _
    $region13: #{tpu_custom_call.1} parent=1 // pred_fallthru
      _
    // Predicated region
    $region14: #{tpu_custom_call.1} parent=1 // pred_check
      _
    $region15: #{tpu_custom_call.1} parent=1 // pred_check_branch
      %27 = sbr.rel (0) target = $region17
    $region16: #{tpu_custom_call.1} parent=1 // pred_region
      %28 = dma.done [#allocation3], 256
    $region17: #{tpu_custom_call.1} parent=1 // pred_fallthru
      _
    %v29 = vld [vmem:[#allocation2] sm:$0xff]
    %v30 = vld [vmem:[#allocation2 + $0x8] sm:$0xff]
    %v31 = vld [vmem:[%s1] sm:$0x1]
    %v32 = vld [vmem:[%s2] sm:$0x1]
    %v33 = vlaneseq
    %v34 = vand.u32 %v33, 127
    %vm35 = vcmp.lt.s32.totalorder %v34, 32
    %v36 = vsel %vm35, %v29, 0.0
    %v37 = vsel %vm35, %v30, 0.0
    %38 = vadd.xlane.f32.xlu0 %v36
    %v39 = vpop.xlane.xlu0 %38
    %40 = vadd.xlane.f32.xlu0 %v37
    %v41 = vpop.xlane.xlu0 %40
    %v42 = vmul.f32 %v39, 0.03125
    %v43 = vmul.f32 %v41, 0.03125
    %v44 = vsub.f32 %v29, %v42
    %v45 = vsub.f32 %v30, %v43
    %v46 = vsel %vm35, %v44, 0.0
    %v47 = vsel %vm35, %v45, 0.0
    %v48 = vmul.f32 %v46, %v46
    %v49 = vmul.f32 %v47, %v47
    %50 = vadd.xlane.f32.xlu0 %v48
    %v51 = vpop.xlane.xlu0 %50
    %52 = vadd.xlane.f32.xlu0 %v49
    %v53 = vpop.xlane.xlu0 %52
    %v54 = vmul.f32 %v51, 0.03125
    %v55 = vmul.f32 %v53, 0.03125
    %v56 = vadd.f32 %v54, 1e-05
    %v57 = vadd.f32 %v55, 1e-05
    %v58 = vrsqrt.pop %v56
    %v59 = vrsqrt.pop %v57
    %v60 = vmul.f32 %v44, %v58
    %v61 = vmul.f32 %v45, %v59
    %v63 = vlaneseq
    %v64 = vshrl.u32 %v63, 7
    %v65 = vsub.s32 0, %v64
    %v66 = vrot.slane %v31, %v65
    %v68 = vmul.f32 %v60, %v66
    %v69 = vmul.f32 %v61, %v66
    %v71 = vlaneseq
    %v72 = vshrl.u32 %v71, 7
    %v73 = vsub.s32 0, %v72
    %v74 = vrot.slane %v32, %v73
    %v76 = vadd.f32 %v68, %v74
    %v77 = vadd.f32 %v69, %v74
    %78 = vst [vmem:[#allocation5] sm:$0xff] %v76
    %79 = vst [vmem:[#allocation5 + $0x8] sm:$0xff] %v77
    // Predicated region
    $region18: #{tpu_custom_call.1} parent=1 // pred_check
      _
    $region19: #{tpu_custom_call.1} parent=1 // pred_check_branch
      %81 = sbr.rel (0) target = $region21
    $region20: #{tpu_custom_call.1} parent=1 // pred_region
      %s83 = ssub.s32 256, 256
      %84 = vsyncadd [#allocation4], %s83
      %s85 = sshll.u32 [#allocation5], 4
      %s86 = int_to_ptr.vmem [resolvable:$true] %s85
      %91 = dma.vmem_to_hbm [thread:$0]  %s86, 256, %s3, [#allocation4], 128, 128, 8
    $region21: #{tpu_custom_call.1} parent=1 // pred_fallthru
      _
    // Predicated region
    $region22: #{tpu_custom_call.1} parent=1 // pred_check
      _
    $region23: #{tpu_custom_call.1} parent=1 // pred_check_branch
      %93 = sbr.rel (0) target = $region25
    $region24: #{tpu_custom_call.1} parent=1 // pred_region
      %94 = dma.done [#allocation4], 256
    $region25: #{tpu_custom_call.1} parent=1 // pred_fallthru
      _
    %95 = vsyncpa [#allocation3], 1
    %96 = vsyncpa [#allocation4], 1

</llo_original>
